<compile_context>
chip_gen: v6e
topology: v6e:2x2x1
jax: 0.10.0
libtpu: 0.0.40
codegen_flags: <defaults>
</compile_context>

<pallas_src>
import numpy as np
import jax
import jax.numpy as jnp
from jax import lax
from jax.experimental import pallas as pl
from jax.experimental.pallas import tpu as pltpu


# ----------------------------------------------------------------------------
# Kernel
# ----------------------------------------------------------------------------
def newsnet_kernel(idx_ref,
                   w1e_ref, g1_ref, bt1_ref,
                   w2_ref, g2_ref, bt2_ref,
                   w3_ref, b3_ref,
                   o_ref):
    B, ctx = idx_ref.shape
    vocab_pad = w1e_ref.shape[0] // ctx
    eps = jnp.float32(1e-5)
    inv_b = jnp.float32(1.0 / B)

    def bn_softsign(h, g, bt):
        # Train-mode BatchNorm1d folded into one scale/shift (one-pass stats,
        # variance clamped at 0 against catastrophic cancellation), then
        # Softsign via the EUP approximate reciprocal (free slot vs VALU div).
        s1 = jnp.sum(h, axis=0, keepdims=True)
        s2 = jnp.sum(h * h, axis=0, keepdims=True)
        mu = s1 * inv_b
        var = jnp.maximum(s2 * inv_b - mu * mu, 0.0)
        scale = g * lax.rsqrt(var + eps)
        shift = bt - mu * scale
        h = h * scale + shift
        return h * pl.reciprocal(1.0 + jnp.abs(h), approx=True)

    # --- embedding gather + adaptive pool + fc1, all as ONE matmul ----------
    # one_hot[b, t*VP + v] = (x_idx[b, t] == v); w1e already contains
    # (pool ∘ embedding ∘ fc1).  fc1 bias omitted: cancelled by bn1's
    # train-mode mean subtraction.
    idx = idx_ref[...]                                        # (B, ctx) int32
    cols = lax.broadcasted_iota(jnp.int32, (B, ctx * vocab_pad), 1)
    oh = cols == idx[:, 0:1]
    for t in range(1, ctx):                                   # ctx is static
        oh = oh | (cols == idx[:, t:t + 1] + t * vocab_pad)
    oh = oh.astype(jnp.float32).astype(w1e_ref.dtype)

    h = jnp.dot(oh, w1e_ref[...], preferred_element_type=jnp.float32)
    h = bn_softsign(h, g1_ref[...], bt1_ref[...])

    # fc2 (bias cancelled by bn2) + bn2 + softsign on a 128-lane hidden slab.
    h = jnp.dot(h.astype(w2_ref.dtype), w2_ref[...],
                preferred_element_type=jnp.float32)
    h = bn_softsign(h, g2_ref[...], bt2_ref[...])

    # fc3 (output lane-padded to 128 -> unmasked, lane-dense store).
    o_ref[...] = (jnp.dot(h.astype(w3_ref.dtype), w3_ref[...],
                          preferred_element_type=jnp.float32) + b3_ref[...])


# ----------------------------------------------------------------------------
# One-time parameter preparation (hoisted off the hot path)
# ----------------------------------------------------------------------------
def _round_up(n, m):
    return ((n + m - 1) // m) * m


def _pad2d(a, rows, cols):
    out = jnp.zeros((rows, cols), a.dtype)
    return out.at[:a.shape[0], :a.shape[1]].set(a)


def prepare_params(params, *, context, hidden_size, num_classes,
                   compute_dtype=jnp.float32):
    """Fold pool+embedding into fc1, zero-pad to lane widths, cast weights."""
    emb_w = params["embedding"]                      # (V, d_embed) f32
    vocab, d_embed = emb_w.shape
    l_in = context * d_embed
    l_out = 16 * hidden_size
    f1 = 4 * hidden_size

    # TODO(synk): non-divisible AdaptiveAvgPool1d shapes need the dense
    # averaging-matrix fold (w1_eff = P @ w1) instead of the reshape-mean fold.
    assert l_in % l_out == 0, "adaptive pool must have an exact integer stride"
    stride = l_in // l_out
    assert d_embed % stride == 0, "pool windows must not straddle tokens"
    d_pool = d_embed // stride

    # Fold AdaptiveAvgPool1d into the embedding table, then fold the pooled
    # embedding + fc1 into one per-token-position selection weight.
    pooled_emb = emb_w.reshape(vocab, d_pool, stride).mean(axis=-1)   # (V, d_pool)
    w1_tok = params["w1"].reshape(context, d_pool, f1)
    w_tok = jnp.einsum("vp,tpf->tvf", pooled_emb, w1_tok)             # (ctx, V, f1)

    vocab_pad = _round_up(vocab, 8)          # sublane-aligned vocab block
    f1_pad = _round_up(f1, 128)
    hid_pad = _round_up(hidden_size, 128)    # hidden 32 -> 128 lanes
    cls_pad = _round_up(num_classes, 128)    # lane-dense final store

    w1e = jnp.zeros((context, vocab_pad, f1_pad), jnp.float32)
    w1e = w1e.at[:, :vocab, :f1].set(w_tok)
    w1e = w1e.reshape(context * vocab_pad, f1_pad)

    return {
        "w1e": w1e.astype(compute_dtype),
        "g1": _pad2d(params["g1"], 1, f1_pad),
        "bt1": _pad2d(params["bt1"], 1, f1_pad),
        "w2": _pad2d(params["w2"], f1_pad, hid_pad).astype(compute_dtype),
        "g2": _pad2d(params["g2"], 1, hid_pad),
        "bt2": _pad2d(params["bt2"], 1, hid_pad),
        "w3": _pad2d(params["w3"], hid_pad, cls_pad).astype(compute_dtype),
        "b3": _pad2d(params["b3"], 1, cls_pad),
        "num_classes": num_classes,
    }


# ----------------------------------------------------------------------------
# Forward wrapper (single pallas_call, zero per-call XLA glue)
# ----------------------------------------------------------------------------
def newsnet_forward(x_idx, prep):
    B = x_idx.shape[0]
    cls_pad = prep["b3"].shape[1]
    args = (x_idx, prep["w1e"], prep["g1"], prep["bt1"],
            prep["w2"], prep["g2"], prep["bt2"], prep["w3"], prep["b3"])
    vmem = lambda: pl.BlockSpec(memory_space=pltpu.MemorySpace.VMEM)
    # Single program, whole arrays resident in VMEM (total footprint < 1 MiB).
    # At M=B=8 the MXU is <7% utilized, so this forward is launch-overhead
    # bound by construction; batch multiple requests to scale.
    # TODO(synk): when batch scales, add a batch grid axis with
    # dimension_semantics=("parallel",) so v7x's 2 TensorCores split it, keep
    # BN statistics global (two-pass or cross-step accumulation, NOT per-tile),
    # and size the batch tile against v7x's 64 MiB VMEM (128 MiB on v5e/v6e).
    out = pl.pallas_call(
        newsnet_kernel,
        out_shape=jax.ShapeDtypeStruct((B, cls_pad), jnp.float32),
        in_specs=[vmem() for _ in args],
        out_specs=vmem(),
        compiler_params=pltpu.CompilerParams(vmem_limit_bytes=32 * 1024 * 1024),
    )(*args)
    return out[:, :prep["num_classes"]]


# ----------------------------------------------------------------------------
# Pure-JAX reference mirroring the PyTorch forward (train-mode BN, f32)
# ----------------------------------------------------------------------------
def adaptive_avgpool1d_matrix(l_in: int, l_out: int) -> jnp.ndarray:
    m = np.zeros((l_in, l_out), dtype=np.float32)
    for i in range(l_out):
        start = (i * l_in) // l_out
        end = -((-(i + 1) * l_in) // l_out)
        m[start:end, i] = 1.0 / (end - start)
    return jnp.asarray(m)


def newsnet_reference(x_idx, params, *, hidden_size, num_classes):
    eps = 1e-5
    emb_w = params["embedding"]
    B, ctx = x_idx.shape
    d_embed = emb_w.shape[1]
    h = jnp.take(emb_w, x_idx, axis=0).reshape(B, ctx * d_embed)
    h = h @ adaptive_avgpool1d_matrix(ctx * d_embed, 16 * hidden_size)

    def bn(h, g, b):
        mu = jnp.mean(h, axis=0, keepdims=True)
        var = jnp.mean((h - mu) ** 2, axis=0, keepdims=True)
        return (h - mu) / jnp.sqrt(var + eps) * g + b

    softsign = lambda v: v / (1.0 + jnp.abs(v))
    h = softsign(bn(h @ params["w1"] + params["b1"], params["g1"], params["bt1"]))
    h = softsign(bn(h @ params["w2"] + params["b2"], params["g2"], params["bt2"]))
    return h @ params["w3"] + params["b3"]


def make_params(key, n_embed, d_embed, hidden_size, num_classes):
    ks = jax.random.split(key, 7)
    f16h, f4h = 16 * hidden_size, 4 * hidden_size
    return {
        "embedding": jax.random.normal(ks[0], (n_embed, d_embed), jnp.float32),
        # weights stored as (in, out) = PyTorch weight.T
        "w1": jax.random.normal(ks[1], (f16h, f4h), jnp.float32) * 0.05,
        "b1": jax.random.normal(ks[2], (1, f4h), jnp.float32) * 0.05,
        "g1": jnp.ones((1, f4h), jnp.float32),
        "bt1": jnp.zeros((1, f4h), jnp.float32),
        "w2": jax.random.normal(ks[3], (f4h, hidden_size), jnp.float32) * 0.05,
        "b2": jax.random.normal(ks[4], (1, hidden_size), jnp.float32) * 0.05,
        "g2": jnp.ones((1, hidden_size), jnp.float32),
        "bt2": jnp.zeros((1, hidden_size), jnp.float32),
        "w3": jax.random.normal(ks[5], (hidden_size, num_classes), jnp.float32) * 0.05,
        "b3": jax.random.normal(ks[6], (1, num_classes), jnp.float32) * 0.05,
    }


if __name__ == "__main__":
    # Small shapes consistent with the module: hidden_size=32, num_classes=7,
    # vocab=50, embed_dim=64, context=16 tokens, batch=8 (f32 sublane; BN
    # batch statistics need B > 1 anyway).
    hidden_size, num_classes = 32, 7
    n_embed, d_embed = 50, 64
    batch, context = 8, 16

    key = jax.random.PRNGKey(0)
    k_params, k_idx = jax.random.split(key)
    params = make_params(k_params, n_embed, d_embed, hidden_size, num_classes)
    x_idx = jax.random.randint(k_idx, (batch, context), 0, n_embed, dtype=jnp.int32)

    ref = np.asarray(jax.block_until_ready(
        newsnet_reference(x_idx, params,
                          hidden_size=hidden_size, num_classes=num_classes)))

    # f32 matmul path: tight check (only the EUP approx reciprocal differs).
    prep_f32 = prepare_params(params, context=context, hidden_size=hidden_size,
                              num_classes=num_classes, compute_dtype=jnp.float32)
    out_f32 = jax.block_until_ready(newsnet_forward(x_idx, prep_f32))
    np.testing.assert_allclose(np.asarray(out_f32), ref, rtol=5e-3, atol=5e-3)

    # bf16 matmul-operand path (f32 accumulation): looser check for bf16
    # weight/activation rounding.
    prep_bf16 = prepare_params(params, context=context, hidden_size=hidden_size,
                               num_classes=num_classes, compute_dtype=jnp.bfloat16)
    out_bf16 = jax.block_until_ready(newsnet_forward(x_idx, prep_bf16))
    np.testing.assert_allclose(np.asarray(out_bf16), ref, rtol=2e-2, atol=2e-2)

    print("KERNEL_OK")
</pallas_src>

<mosaic_0001>
module attributes {stable_mosaic.version = 11 : i64} {
  func.func @newsnet_kernel(%arg0: memref<8x16xi32, #tpu.memory_space<vmem>>, %arg1: memref<896x128xf32, #tpu.memory_space<vmem>>, %arg2: memref<1x128xf32, #tpu.memory_space<vmem>>, %arg3: memref<1x128xf32, #tpu.memory_space<vmem>>, %arg4: memref<128x128xf32, #tpu.memory_space<vmem>>, %arg5: memref<1x128xf32, #tpu.memory_space<vmem>>, %arg6: memref<1x128xf32, #tpu.memory_space<vmem>>, %arg7: memref<128x128xf32, #tpu.memory_space<vmem>>, %arg8: memref<1x128xf32, #tpu.memory_space<vmem>>, %arg9: memref<8x128xf32, #tpu.memory_space<vmem>>) attributes {dimension_semantics = [], scalar_prefetch = 0 : i64, scratch_operands = 0 : i64, tpu.core_type = #tpu.core_type<tc>} {
    %c0 = arith.constant 0 : index
    %c0_0 = arith.constant 0 : index
    %0 = vector.load %arg0[%c0, %c0_0] : memref<8x16xi32, #tpu.memory_space<vmem>>, vector<8x16xi32>
    %1 = tpu.iota {dimensions = array<i32: 1>} : vector<8x896xi32>
    %2 = vector.extract_strided_slice %0 {offsets = [0, 0], sizes = [8, 1], strides = [1, 1]} : vector<8x16xi32> to vector<8x1xi32>
    %3 = vector.broadcast %2 : vector<8x1xi32> to vector<8x896xi32>
    %4 = arith.cmpi eq, %1, %3 : vector<8x896xi32>
    %5 = vector.extract_strided_slice %0 {offsets = [0, 1], sizes = [8, 1], strides = [1, 1]} : vector<8x16xi32> to vector<8x1xi32>
    %c56_i32 = arith.constant 56 : i32
    %6 = vector.broadcast %c56_i32 : i32 to vector<8x1xi32>
    %7 = arith.addi %5, %6 : vector<8x1xi32>
    %8 = vector.broadcast %7 : vector<8x1xi32> to vector<8x896xi32>
    %9 = arith.cmpi eq, %1, %8 : vector<8x896xi32>
    %10 = arith.ori %4, %9 : vector<8x896xi1>
    %11 = vector.extract_strided_slice %0 {offsets = [0, 2], sizes = [8, 1], strides = [1, 1]} : vector<8x16xi32> to vector<8x1xi32>
    %c112_i32 = arith.constant 112 : i32
    %12 = vector.broadcast %c112_i32 : i32 to vector<8x1xi32>
    %13 = arith.addi %11, %12 : vector<8x1xi32>
    %14 = vector.broadcast %13 : vector<8x1xi32> to vector<8x896xi32>
    %15 = arith.cmpi eq, %1, %14 : vector<8x896xi32>
    %16 = arith.ori %10, %15 : vector<8x896xi1>
    %17 = vector.extract_strided_slice %0 {offsets = [0, 3], sizes = [8, 1], strides = [1, 1]} : vector<8x16xi32> to vector<8x1xi32>
    %c168_i32 = arith.constant 168 : i32
    %18 = vector.broadcast %c168_i32 : i32 to vector<8x1xi32>
    %19 = arith.addi %17, %18 : vector<8x1xi32>
    %20 = vector.broadcast %19 : vector<8x1xi32> to vector<8x896xi32>
    %21 = arith.cmpi eq, %1, %20 : vector<8x896xi32>
    %22 = arith.ori %16, %21 : vector<8x896xi1>
    %23 = vector.extract_strided_slice %0 {offsets = [0, 4], sizes = [8, 1], strides = [1, 1]} : vector<8x16xi32> to vector<8x1xi32>
    %c224_i32 = arith.constant 224 : i32
    %24 = vector.broadcast %c224_i32 : i32 to vector<8x1xi32>
    %25 = arith.addi %23, %24 : vector<8x1xi32>
    %26 = vector.broadcast %25 : vector<8x1xi32> to vector<8x896xi32>
    %27 = arith.cmpi eq, %1, %26 : vector<8x896xi32>
    %28 = arith.ori %22, %27 : vector<8x896xi1>
    %29 = vector.extract_strided_slice %0 {offsets = [0, 5], sizes = [8, 1], strides = [1, 1]} : vector<8x16xi32> to vector<8x1xi32>
    %c280_i32 = arith.constant 280 : i32
    %30 = vector.broadcast %c280_i32 : i32 to vector<8x1xi32>
    %31 = arith.addi %29, %30 : vector<8x1xi32>
    %32 = vector.broadcast %31 : vector<8x1xi32> to vector<8x896xi32>
    %33 = arith.cmpi eq, %1, %32 : vector<8x896xi32>
    %34 = arith.ori %28, %33 : vector<8x896xi1>
    %35 = vector.extract_strided_slice %0 {offsets = [0, 6], sizes = [8, 1], strides = [1, 1]} : vector<8x16xi32> to vector<8x1xi32>
    %c336_i32 = arith.constant 336 : i32
    %36 = vector.broadcast %c336_i32 : i32 to vector<8x1xi32>
    %37 = arith.addi %35, %36 : vector<8x1xi32>
    %38 = vector.broadcast %37 : vector<8x1xi32> to vector<8x896xi32>
    %39 = arith.cmpi eq, %1, %38 : vector<8x896xi32>
    %40 = arith.ori %34, %39 : vector<8x896xi1>
    %41 = vector.extract_strided_slice %0 {offsets = [0, 7], sizes = [8, 1], strides = [1, 1]} : vector<8x16xi32> to vector<8x1xi32>
    %c392_i32 = arith.constant 392 : i32
    %42 = vector.broadcast %c392_i32 : i32 to vector<8x1xi32>
    %43 = arith.addi %41, %42 : vector<8x1xi32>
    %44 = vector.broadcast %43 : vector<8x1xi32> to vector<8x896xi32>
    %45 = arith.cmpi eq, %1, %44 : vector<8x896xi32>
    %46 = arith.ori %40, %45 : vector<8x896xi1>
    %47 = vector.extract_strided_slice %0 {offsets = [0, 8], sizes = [8, 1], strides = [1, 1]} : vector<8x16xi32> to vector<8x1xi32>
    %c448_i32 = arith.constant 448 : i32
    %48 = vector.broadcast %c448_i32 : i32 to vector<8x1xi32>
    %49 = arith.addi %47, %48 : vector<8x1xi32>
    %50 = vector.broadcast %49 : vector<8x1xi32> to vector<8x896xi32>
    %51 = arith.cmpi eq, %1, %50 : vector<8x896xi32>
    %52 = arith.ori %46, %51 : vector<8x896xi1>
    %53 = vector.extract_strided_slice %0 {offsets = [0, 9], sizes = [8, 1], strides = [1, 1]} : vector<8x16xi32> to vector<8x1xi32>
    %c504_i32 = arith.constant 504 : i32
    %54 = vector.broadcast %c504_i32 : i32 to vector<8x1xi32>
    %55 = arith.addi %53, %54 : vector<8x1xi32>
    %56 = vector.broadcast %55 : vector<8x1xi32> to vector<8x896xi32>
    %57 = arith.cmpi eq, %1, %56 : vector<8x896xi32>
    %58 = arith.ori %52, %57 : vector<8x896xi1>
    %59 = vector.extract_strided_slice %0 {offsets = [0, 10], sizes = [8, 1], strides = [1, 1]} : vector<8x16xi32> to vector<8x1xi32>
    %c560_i32 = arith.constant 560 : i32
    %60 = vector.broadcast %c560_i32 : i32 to vector<8x1xi32>
    %61 = arith.addi %59, %60 : vector<8x1xi32>
    %62 = vector.broadcast %61 : vector<8x1xi32> to vector<8x896xi32>
    %63 = arith.cmpi eq, %1, %62 : vector<8x896xi32>
    %64 = arith.ori %58, %63 : vector<8x896xi1>
    %65 = vector.extract_strided_slice %0 {offsets = [0, 11], sizes = [8, 1], strides = [1, 1]} : vector<8x16xi32> to vector<8x1xi32>
    %c616_i32 = arith.constant 616 : i32
    %66 = vector.broadcast %c616_i32 : i32 to vector<8x1xi32>
    %67 = arith.addi %65, %66 : vector<8x1xi32>
    %68 = vector.broadcast %67 : vector<8x1xi32> to vector<8x896xi32>
    %69 = arith.cmpi eq, %1, %68 : vector<8x896xi32>
    %70 = arith.ori %64, %69 : vector<8x896xi1>
    %71 = vector.extract_strided_slice %0 {offsets = [0, 12], sizes = [8, 1], strides = [1, 1]} : vector<8x16xi32> to vector<8x1xi32>
    %c672_i32 = arith.constant 672 : i32
    %72 = vector.broadcast %c672_i32 : i32 to vector<8x1xi32>
    %73 = arith.addi %71, %72 : vector<8x1xi32>
    %74 = vector.broadcast %73 : vector<8x1xi32> to vector<8x896xi32>
    %75 = arith.cmpi eq, %1, %74 : vector<8x896xi32>
    %76 = arith.ori %70, %75 : vector<8x896xi1>
    %77 = vector.extract_strided_slice %0 {offsets = [0, 13], sizes = [8, 1], strides = [1, 1]} : vector<8x16xi32> to vector<8x1xi32>
    %c728_i32 = arith.constant 728 : i32
    %78 = vector.broadcast %c728_i32 : i32 to vector<8x1xi32>
    %79 = arith.addi %77, %78 : vector<8x1xi32>
    %80 = vector.broadcast %79 : vector<8x1xi32> to vector<8x896xi32>
    %81 = arith.cmpi eq, %1, %80 : vector<8x896xi32>
    %82 = arith.ori %76, %81 : vector<8x896xi1>
    %83 = vector.extract_strided_slice %0 {offsets = [0, 14], sizes = [8, 1], strides = [1, 1]} : vector<8x16xi32> to vector<8x1xi32>
    %c784_i32 = arith.constant 784 : i32
    %84 = vector.broadcast %c784_i32 : i32 to vector<8x1xi32>
    %85 = arith.addi %83, %84 : vector<8x1xi32>
    %86 = vector.broadcast %85 : vector<8x1xi32> to vector<8x896xi32>
    %87 = arith.cmpi eq, %1, %86 : vector<8x896xi32>
    %88 = arith.ori %82, %87 : vector<8x896xi1>
    %89 = vector.extract_strided_slice %0 {offsets = [0, 15], sizes = [8, 1], strides = [1, 1]} : vector<8x16xi32> to vector<8x1xi32>
    %c840_i32 = arith.constant 840 : i32
    %90 = vector.broadcast %c840_i32 : i32 to vector<8x1xi32>
    %91 = arith.addi %89, %90 : vector<8x1xi32>
    %92 = vector.broadcast %91 : vector<8x1xi32> to vector<8x896xi32>
    %93 = arith.cmpi eq, %1, %92 : vector<8x896xi32>
    %94 = arith.ori %88, %93 : vector<8x896xi1>
    %95 = arith.extui %94 : vector<8x896xi1> to vector<8x896xi32>
    %96 = arith.sitofp %95 : vector<8x896xi32> to vector<8x896xf32>
    %c0_1 = arith.constant 0 : index
    %c0_2 = arith.constant 0 : index
    %97 = vector.load %arg1[%c0_1, %c0_2] : memref<896x128xf32, #tpu.memory_space<vmem>>, vector<896x128xf32>
    %cst = arith.constant dense<0.000000e+00> : vector<8x128xf32>
    %98 = tpu.matmul %96, %97, %cst {dimension_numbers = #tpu.dot_dimension_numbers<[1], [0], [0], [1], [0, 0, 1, 1], [], []>} : vector<8x896xf32>, vector<896x128xf32>, vector<8x128xf32> -> vector<8x128xf32>
    %c0_3 = arith.constant 0 : index
    %c0_4 = arith.constant 0 : index
    %99 = vector.load %arg2[%c0_3, %c0_4] : memref<1x128xf32, #tpu.memory_space<vmem>>, vector<1x128xf32>
    %c0_5 = arith.constant 0 : index
    %c0_6 = arith.constant 0 : index
    %100 = vector.load %arg3[%c0_5, %c0_6] : memref<1x128xf32, #tpu.memory_space<vmem>>, vector<1x128xf32>
    %cst_7 = arith.constant dense<0.000000e+00> : vector<128xf32>
    %101 = vector.multi_reduction <add>, %98, %cst_7 [0] : vector<8x128xf32> to vector<128xf32>
    %102 = vector.shape_cast %101 : vector<128xf32> to vector<1x128xf32>
    %103 = arith.mulf %98, %98 : vector<8x128xf32>
    %cst_8 = arith.constant dense<0.000000e+00> : vector<128xf32>
    %104 = vector.multi_reduction <add>, %103, %cst_8 [0] : vector<8x128xf32> to vector<128xf32>
    %105 = vector.shape_cast %104 : vector<128xf32> to vector<1x128xf32>
    %cst_9 = arith.constant 1.250000e-01 : f32
    %106 = vector.broadcast %cst_9 : f32 to vector<1x128xf32>
    %107 = arith.mulf %102, %106 : vector<1x128xf32>
    %cst_10 = arith.constant 1.250000e-01 : f32
    %108 = vector.broadcast %cst_10 : f32 to vector<1x128xf32>
    %109 = arith.mulf %105, %108 : vector<1x128xf32>
    %110 = arith.mulf %107, %107 : vector<1x128xf32>
    %111 = arith.subf %109, %110 : vector<1x128xf32>
    %cst_11 = arith.constant 0.000000e+00 : f32
    %112 = vector.broadcast %cst_11 : f32 to vector<1x128xf32>
    %113 = arith.maximumf %111, %112 : vector<1x128xf32>
    %cst_12 = arith.constant 9.99999974E-6 : f32
    %114 = vector.broadcast %cst_12 : f32 to vector<1x128xf32>
    %115 = arith.addf %113, %114 : vector<1x128xf32>
    %116 = math.rsqrt %115 : vector<1x128xf32>
    %117 = arith.mulf %99, %116 : vector<1x128xf32>
    %118 = arith.mulf %107, %117 : vector<1x128xf32>
    %119 = arith.subf %100, %118 : vector<1x128xf32>
    %120 = vector.broadcast %117 : vector<1x128xf32> to vector<8x128xf32>
    %121 = arith.mulf %98, %120 : vector<8x128xf32>
    %122 = vector.broadcast %119 : vector<1x128xf32> to vector<8x128xf32>
    %123 = arith.addf %121, %122 : vector<8x128xf32>
    %124 = math.absf %123 : vector<8x128xf32>
    %cst_13 = arith.constant 1.000000e+00 : f32
    %125 = vector.broadcast %cst_13 : f32 to vector<8x128xf32>
    %126 = arith.addf %125, %124 : vector<8x128xf32>
    %127 = tpu.reciprocal %126 {approx = true} : vector<8x128xf32> -> vector<8x128xf32>
    %128 = arith.mulf %123, %127 : vector<8x128xf32>
    %c0_14 = arith.constant 0 : index
    %c0_15 = arith.constant 0 : index
    %129 = vector.load %arg4[%c0_14, %c0_15] : memref<128x128xf32, #tpu.memory_space<vmem>>, vector<128x128xf32>
    %cst_16 = arith.constant dense<0.000000e+00> : vector<8x128xf32>
    %130 = tpu.matmul %128, %129, %cst_16 {dimension_numbers = #tpu.dot_dimension_numbers<[1], [0], [0], [1], [0, 0, 1, 1], [], []>} : vector<8x128xf32>, vector<128x128xf32>, vector<8x128xf32> -> vector<8x128xf32>
    %c0_17 = arith.constant 0 : index
    %c0_18 = arith.constant 0 : index
    %131 = vector.load %arg5[%c0_17, %c0_18] : memref<1x128xf32, #tpu.memory_space<vmem>>, vector<1x128xf32>
    %c0_19 = arith.constant 0 : index
    %c0_20 = arith.constant 0 : index
    %132 = vector.load %arg6[%c0_19, %c0_20] : memref<1x128xf32, #tpu.memory_space<vmem>>, vector<1x128xf32>
    %cst_21 = arith.constant dense<0.000000e+00> : vector<128xf32>
    %133 = vector.multi_reduction <add>, %130, %cst_21 [0] : vector<8x128xf32> to vector<128xf32>
    %134 = vector.shape_cast %133 : vector<128xf32> to vector<1x128xf32>
    %135 = arith.mulf %130, %130 : vector<8x128xf32>
    %cst_22 = arith.constant dense<0.000000e+00> : vector<128xf32>
    %136 = vector.multi_reduction <add>, %135, %cst_22 [0] : vector<8x128xf32> to vector<128xf32>
    %137 = vector.shape_cast %136 : vector<128xf32> to vector<1x128xf32>
    %cst_23 = arith.constant 1.250000e-01 : f32
    %138 = vector.broadcast %cst_23 : f32 to vector<1x128xf32>
    %139 = arith.mulf %134, %138 : vector<1x128xf32>
    %cst_24 = arith.constant 1.250000e-01 : f32
    %140 = vector.broadcast %cst_24 : f32 to vector<1x128xf32>
    %141 = arith.mulf %137, %140 : vector<1x128xf32>
    %142 = arith.mulf %139, %139 : vector<1x128xf32>
    %143 = arith.subf %141, %142 : vector<1x128xf32>
    %cst_25 = arith.constant 0.000000e+00 : f32
    %144 = vector.broadcast %cst_25 : f32 to vector<1x128xf32>
    %145 = arith.maximumf %143, %144 : vector<1x128xf32>
    %cst_26 = arith.constant 9.99999974E-6 : f32
    %146 = vector.broadcast %cst_26 : f32 to vector<1x128xf32>
    %147 = arith.addf %145, %146 : vector<1x128xf32>
    %148 = math.rsqrt %147 : vector<1x128xf32>
    %149 = arith.mulf %131, %148 : vector<1x128xf32>
    %150 = arith.mulf %139, %149 : vector<1x128xf32>
    %151 = arith.subf %132, %150 : vector<1x128xf32>
    %152 = vector.broadcast %149 : vector<1x128xf32> to vector<8x128xf32>
    %153 = arith.mulf %130, %152 : vector<8x128xf32>
    %154 = vector.broadcast %151 : vector<1x128xf32> to vector<8x128xf32>
    %155 = arith.addf %153, %154 : vector<8x128xf32>
    %156 = math.absf %155 : vector<8x128xf32>
    %cst_27 = arith.constant 1.000000e+00 : f32
    %157 = vector.broadcast %cst_27 : f32 to vector<8x128xf32>
    %158 = arith.addf %157, %156 : vector<8x128xf32>
    %159 = tpu.reciprocal %158 {approx = true} : vector<8x128xf32> -> vector<8x128xf32>
    %160 = arith.mulf %155, %159 : vector<8x128xf32>
    %c0_28 = arith.constant 0 : index
    %c0_29 = arith.constant 0 : index
    %161 = vector.load %arg7[%c0_28, %c0_29] : memref<128x128xf32, #tpu.memory_space<vmem>>, vector<128x128xf32>
    %cst_30 = arith.constant dense<0.000000e+00> : vector<8x128xf32>
    %162 = tpu.matmul %160, %161, %cst_30 {dimension_numbers = #tpu.dot_dimension_numbers<[1], [0], [0], [1], [0, 0, 1, 1], [], []>} : vector<8x128xf32>, vector<128x128xf32>, vector<8x128xf32> -> vector<8x128xf32>
    %c0_31 = arith.constant 0 : index
    %c0_32 = arith.constant 0 : index
    %163 = vector.load %arg8[%c0_31, %c0_32] : memref<1x128xf32, #tpu.memory_space<vmem>>, vector<1x128xf32>
    %164 = vector.broadcast %163 : vector<1x128xf32> to vector<8x128xf32>
    %165 = arith.addf %162, %164 : vector<8x128xf32>
    %c0_33 = arith.constant 0 : index
    %c0_34 = arith.constant 0 : index
    %166 = vector.load %arg9[%c0_33, %c0_34] : memref<8x128xf32, #tpu.memory_space<vmem>>, vector<8x128xf32>
    tpu.vector_store %arg9[%c0_33, %c0_34], %165 {strides = array<i32>} : memref<8x128xf32, #tpu.memory_space<vmem>>, vector<8x128xf32>,
    return
  }
}

</mosaic_0001>

<llo_original>
// kernel: tpu_custom_call.1
$region0: #{tpu_custom_call.1}
  #allocation0 [shape = 'u32[]', space=smem, size = 0x4, offset = 0x4, fixed_abs, tag = 'smem constant byte address 0x4 - core index']
  #allocation1 [shape = 'u32[144,128]{1,0:T(1,128)}', space=vmem, size = 0x12000, scoped, tag = 'internal scratch']
  %s0 = inlined_call_operand.hbm [shape: s32[8,16], index: 0, kind: input, shape index: {}]
  %s1 = inlined_call_operand.hbm [shape: f32[896,128], index: 1, kind: input, shape index: {}]
  %s2 = inlined_call_operand.vmem [shape: f32[1,128], index: 2, kind: input, shape index: {}]
  %s3 = inlined_call_operand.vmem [shape: f32[1,128], index: 3, kind: input, shape index: {}]
  %s4 = inlined_call_operand.hbm [shape: f32[128,128], index: 4, kind: input, shape index: {}]
  %s5 = inlined_call_operand.vmem [shape: f32[1,128], index: 5, kind: input, shape index: {}]
  %s6 = inlined_call_operand.vmem [shape: f32[1,128], index: 6, kind: input, shape index: {}]
  %s7 = inlined_call_operand.hbm [shape: f32[128,128], index: 7, kind: input, shape index: {}]
  %s8 = inlined_call_operand.vmem [shape: f32[1,128], index: 8, kind: input, shape index: {}]
  %s9 = inlined_call_operand.hbm [shape: f32[8,128], index: 9, kind: output, shape index: {}]
  %s10 = sld [smem:[#allocation0]]
  $region62: #{tpu_custom_call.1} parent=0
    _
  %s12 = ssub.s32 1, %s10
  %s13 = scalar_select 0, %s12, %s10
  $region1: #{tpu_custom_call.1} parent=0
    #allocation2 [shape = 'u8[4096]{0}', space=vmem, size = 0x1000, scoped, tag = 'input window, operand 0, single buffered']
    #allocation3 [shape = 's32[1]{0}', space=sflag, size = 0x4, scoped, tag = 'scoped memory for tpu_custom_call.1']
    #allocation4 [shape = 's32[1]{0}', space=sflag, size = 0x4, scoped, tag = 'scoped memory for tpu_custom_call.1']
    #allocation5 [shape = 'u8[458752]{0}', space=vmem, size = 0x70000, scoped, tag = 'input window, operand 1, single buffered']
    #allocation6 [shape = 's32[1]{0}', space=sflag, size = 0x4, scoped, tag = 'scoped memory for tpu_custom_call.1']
    #allocation7 [shape = 'u8[65536]{0}', space=vmem, size = 0x10000, scoped, tag = 'input window, operand 4, single buffered']
    #allocation8 [shape = 'u8[65536]{0}', space=vmem, size = 0x10000, scoped, tag = 'input window, operand 7, single buffered']
    #allocation9 [shape = 's32[1]{0}', space=sflag, size = 0x4, scoped, tag = 'scoped memory for tpu_custom_call.1']
    #allocation10 [shape = 'u8[4096]{0}', space=vmem, size = 0x1000, scoped, tag = 'output window, operand 0, single buffered']
    %14 = vsyncpa [#allocation3], 0
    %15 = vsyncpa [#allocation6], 0
    %16 = vsyncpa [#allocation9], 0
    %17 = vsyncpa [#allocation4], 0
    // Predicated region
    $region2: #{tpu_custom_call.1} parent=1 // pred_check
      _
    $region3: #{tpu_custom_call.1} parent=1 // pred_check_branch
      %19 = sbr.rel (0) target = $region5
    $region4: #{tpu_custom_call.1} parent=1 // pred_region
      %s21 = ssub.s32 128, 128
      %22 = vsyncadd [#allocation3], %s21
      %s24 = sshll.u32 [#allocation2], 4
      %s25 = int_to_ptr.vmem [resolvable:$true] %s24
      %27 = dma.hbm_to_vmem [thread:$0]  %s0, 128, %s25, [#allocation3]
    $region5: #{tpu_custom_call.1} parent=1 // pred_fallthru
      _
    // Predicated region
    $region6: #{tpu_custom_call.1} parent=1 // pred_check
      _
    $region7: #{tpu_custom_call.1} parent=1 // pred_check_branch
      %29 = sbr.rel (0) target = $region9
    $region8: #{tpu_custom_call.1} parent=1 // pred_region
      %s31 = ssub.s32 14336, 14336
      %32 = vsyncadd [#allocation6], %s31
      %s33 = sshll.u32 [#allocation5], 4
      %s34 = int_to_ptr.vmem [resolvable:$true] %s33
      %39 = dma.hbm_to_vmem [thread:$0]  %s1, 14336, %s34, [#allocation6], 128, 128, 8
    $region9: #{tpu_custom_call.1} parent=1 // pred_fallthru
      _
    // Predicated region
    $region10: #{tpu_custom_call.1} parent=1 // pred_check
      _
    $region11: #{tpu_custom_call.1} parent=1 // pred_check_branch
      %41 = sbr.rel (0) target = $region13
    $region12: #{tpu_custom_call.1} parent=1 // pred_region
      _
    $region13: #{tpu_custom_call.1} parent=1 // pred_fallthru
      _
    // Predicated region
    $region14: #{tpu_custom_call.1} parent=1 // pred_check
      _
    $region15: #{tpu_custom_call.1} parent=1 // pred_check_branch
      %43 = sbr.rel (0) target = $region17
    $region16: #{tpu_custom_call.1} parent=1 // pred_region
      _
    $region17: #{tpu_custom_call.1} parent=1 // pred_fallthru
      _
    // Predicated region
    $region18: #{tpu_custom_call.1} parent=1 // pred_check
      _
    $region19: #{tpu_custom_call.1} parent=1 // pred_check_branch
      %45 = sbr.rel (0) target = $region21
    $region20: #{tpu_custom_call.1} parent=1 // pred_region
      %s47 = ssub.s32 2048, 2048
      %48 = vsyncadd [#allocation6], %s47
      %s49 = sshll.u32 [#allocation7], 4
      %s50 = int_to_ptr.vmem [resolvable:$true] %s49
      %55 = dma.hbm_to_vmem [thread:$0]  %s4, 2048, %s50, [#allocation6], 128, 128, 8
    $region21: #{tpu_custom_call.1} parent=1 // pred_fallthru
      _
    // Predicated region
    $region22: #{tpu_custom_call.1} parent=1 // pred_check
      _
    $region23: #{tpu_custom_call.1} parent=1 // pred_check_branch
      %57 = sbr.rel (0) target = $region25
    $region24: #{tpu_custom_call.1} parent=1 // pred_region
      _
    $region25: #{tpu_custom_call.1} parent=1 // pred_fallthru
      _
    // Predicated region
    $region26: #{tpu_custom_call.1} parent=1 // pred_check
      _
    $region27: #{tpu_custom_call.1} parent=1 // pred_check_branch
      %59 = sbr.rel (0) target = $region29
    $region28: #{tpu_custom_call.1} parent=1 // pred_region
      _
    $region29: #{tpu_custom_call.1} parent=1 // pred_fallthru
      _
    // Predicated region
    $region30: #{tpu_custom_call.1} parent=1 // pred_check
      _
    $region31: #{tpu_custom_call.1} parent=1 // pred_check_branch
      %61 = sbr.rel (0) target = $region33
    $region32: #{tpu_custom_call.1} parent=1 // pred_region
      %s63 = ssub.s32 2048, 2048
      %64 = vsyncadd [#allocation9], %s63
      %s65 = sshll.u32 [#allocation8], 4
      %s66 = int_to_ptr.vmem [resolvable:$true] %s65
      %71 = dma.hbm_to_vmem [thread:$0]  %s7, 2048, %s66, [#allocation9], 128, 128, 8
    $region33: #{tpu_custom_call.1} parent=1 // pred_fallthru
      _
    // Predicated region
    $region34: #{tpu_custom_call.1} parent=1 // pred_check
      _
    $region35: #{tpu_custom_call.1} parent=1 // pred_check_branch
      %73 = sbr.rel (0) target = $region37
    $region36: #{tpu_custom_call.1} parent=1 // pred_region
      _
    $region37: #{tpu_custom_call.1} parent=1 // pred_fallthru
      _
    // Predicated region
    $region38: #{tpu_custom_call.1} parent=1 // pred_check
      _
    $region39: #{tpu_custom_call.1} parent=1 // pred_check_branch
      %75 = sbr.rel (0) target = $region41
    $region40: #{tpu_custom_call.1} parent=1 // pred_region
      %76 = dma.done [#allocation3], 128
    $region41: #{tpu_custom_call.1} parent=1 // pred_fallthru
      _
    // Predicated region
    $region42: #{tpu_custom_call.1} parent=1 // pred_check
      _
    $region43: #{tpu_custom_call.1} parent=1 // pred_check_branch
      %78 = sbr.rel (0) target = $region45
    $region44: #{tpu_custom_call.1} parent=1 // pred_region
      %79 = dma.done [#allocation6], 14336
    $region45: #{tpu_custom_call.1} parent=1 // pred_fallthru
      _
    // Predicated region
    $region46: #{tpu_custom_call.1} parent=1 // pred_check
      _
    $region47: #{tpu_custom_call.1} parent=1 // pred_check_branch
      %81 = sbr.rel (0) target = $region49
    $region48: #{tpu_custom_call.1} parent=1 // pred_region
      %82 = dma.done [#allocation6], 2048
    $region49: #{tpu_custom_call.1} parent=1 // pred_fallthru
      _
    // Predicated region
    $region50: #{tpu_custom_call.1} parent=1 // pred_check
      _
    $region51: #{tpu_custom_call.1} parent=1 // pred_check_branch
      %84 = sbr.rel (0) target = $region53
    $region52: #{tpu_custom_call.1} parent=1 // pred_region
      %85 = dma.done [#allocation9], 2048
    $region53: #{tpu_custom_call.1} parent=1 // pred_fallthru
      _
    %v86 = vld [vmem:[#allocation2] sm:$0xff]
    %v87 = vlaneseq
    %v88 = vand.u32 %v87, 127
    %v89 = vadd.s32 %v88, 128
    %v90 = vadd.s32 %v88, 256
    %v91 = vadd.s32 %v88, 384
    %v92 = vadd.s32 %v88, 512
    %v93 = vadd.s32 %v88, 640
    %v94 = vadd.s32 %v88, 768
    %95 = vset.pattern.permute.xlu0 0
    %96 = vperm.xlu0 %95, %v86
    %v97 = vpop.permute.xlu0 %96
    %vm98 = vcmp.eq.s32.totalorder %v88, %v97
    %vm99 = vcmp.eq.s32.totalorder %v89, %v97
    %vm100 = vcmp.eq.s32.totalorder %v90, %v97
    %vm101 = vcmp.eq.s32.totalorder %v91, %v97
    %vm102 = vcmp.eq.s32.totalorder %v92, %v97
    %vm103 = vcmp.eq.s32.totalorder %v93, %v97
    %vm104 = vcmp.eq.s32.totalorder %v94, %v97
    %v105 = vadd.s32 %v86, 56
    %106 = vset.pattern.permute.xlu0 1
    %107 = vperm.xlu0 %106, %v105
    %v108 = vpop.permute.xlu0 %107
    %vm109 = vcmp.eq.s32.totalorder %v88, %v108
    %vm110 = vcmp.eq.s32.totalorder %v89, %v108
    %vm111 = vcmp.eq.s32.totalorder %v90, %v108
    %vm112 = vcmp.eq.s32.totalorder %v91, %v108
    %vm113 = vcmp.eq.s32.totalorder %v92, %v108
    %vm114 = vcmp.eq.s32.totalorder %v93, %v108
    %vm115 = vcmp.eq.s32.totalorder %v94, %v108
    %vm116 = vmor %vm98, %vm109
    %vm117 = vmor %vm99, %vm110
    %vm118 = vmor %vm100, %vm111
    %vm119 = vmor %vm101, %vm112
    %vm120 = vmor %vm102, %vm113
    %vm121 = vmor %vm103, %vm114
    %vm122 = vmor %vm104, %vm115
    %v123 = vadd.s32 %v86, 112
    %124 = vset.pattern.permute.xlu0 2
    %125 = vperm.xlu0 %124, %v123
    %v126 = vpop.permute.xlu0 %125
    %vm127 = vcmp.eq.s32.totalorder %v88, %v126
    %vm128 = vcmp.eq.s32.totalorder %v89, %v126
    %vm129 = vcmp.eq.s32.totalorder %v90, %v126
    %vm130 = vcmp.eq.s32.totalorder %v91, %v126
    %vm131 = vcmp.eq.s32.totalorder %v92, %v126
    %vm132 = vcmp.eq.s32.totalorder %v93, %v126
    %vm133 = vcmp.eq.s32.totalorder %v94, %v126
    %vm134 = vmor %vm116, %vm127
    %vm135 = vmor %vm117, %vm128
    %vm136 = vmor %vm118, %vm129
    %vm137 = vmor %vm119, %vm130
    %vm138 = vmor %vm120, %vm131
    %vm139 = vmor %vm121, %vm132
    %vm140 = vmor %vm122, %vm133
    %v141 = vadd.s32 %v86, 168
    %142 = vset.pattern.permute.xlu0 3
    %143 = vperm.xlu0 %142, %v141
    %v144 = vpop.permute.xlu0 %143
    %vm145 = vcmp.eq.s32.totalorder %v88, %v144
    %vm146 = vcmp.eq.s32.totalorder %v89, %v144
    %vm147 = vcmp.eq.s32.totalorder %v90, %v144
    %vm148 = vcmp.eq.s32.totalorder %v91, %v144
    %vm149 = vcmp.eq.s32.totalorder %v92, %v144
    %vm150 = vcmp.eq.s32.totalorder %v93, %v144
    %vm151 = vcmp.eq.s32.totalorder %v94, %v144
    %vm152 = vmor %vm134, %vm145
    %vm153 = vmor %vm135, %vm146
    %vm154 = vmor %vm136, %vm147
    %vm155 = vmor %vm137, %vm148
    %vm156 = vmor %vm138, %vm149
    %vm157 = vmor %vm139, %vm150
    %vm158 = vmor %vm140, %vm151
    %v159 = vadd.s32 %v86, 224
    %160 = vset.pattern.permute.xlu0 4
    %161 = vperm.xlu0 %160, %v159
    %v162 = vpop.permute.xlu0 %161
    %vm163 = vcmp.eq.s32.totalorder %v88, %v162
    %vm164 = vcmp.eq.s32.totalorder %v89, %v162
    %vm165 = vcmp.eq.s32.totalorder %v90, %v162
    %vm166 = vcmp.eq.s32.totalorder %v91, %v162
    %vm167 = vcmp.eq.s32.totalorder %v92, %v162
    %vm168 = vcmp.eq.s32.totalorder %v93, %v162
    %vm169 = vcmp.eq.s32.totalorder %v94, %v162
    %vm170 = vmor %vm152, %vm163
    %vm171 = vmor %vm153, %vm164
    %vm172 = vmor %vm154, %vm165
    %vm173 = vmor %vm155, %vm166
    %vm174 = vmor %vm156, %vm167
    %vm175 = vmor %vm157, %vm168
    %vm176 = vmor %vm158, %vm169
    %v177 = vadd.s32 %v86, 280
    %178 = vset.pattern.permute.xlu0 5
    %179 = vperm.xlu0 %178, %v177
    %v180 = vpop.permute.xlu0 %179
    %vm181 = vcmp.eq.s32.totalorder %v88, %v180
    %vm182 = vcmp.eq.s32.totalorder %v89, %v180
    %vm183 = vcmp.eq.s32.totalorder %v90, %v180
    %vm184 = vcmp.eq.s32.totalorder %v91, %v180
    %vm185 = vcmp.eq.s32.totalorder %v92, %v180
    %vm186 = vcmp.eq.s32.totalorder %v93, %v180
    %vm187 = vcmp.eq.s32.totalorder %v94, %v180
    %vm188 = vmor %vm170, %vm181
    %vm189 = vmor %vm171, %vm182
    %vm190 = vmor %vm172, %vm183
    %vm191 = vmor %vm173, %vm184
    %vm192 = vmor %vm174, %vm185
    %vm193 = vmor %vm175, %vm186
    %vm194 = vmor %vm176, %vm187
    %v195 = vadd.s32 %v86, 336
    %196 = vset.pattern.permute.xlu0 6
    %197 = vperm.xlu0 %196, %v195
    %v198 = vpop.permute.xlu0 %197
    %vm199 = vcmp.eq.s32.totalorder %v88, %v198
    %vm200 = vcmp.eq.s32.totalorder %v89, %v198
    %vm201 = vcmp.eq.s32.totalorder %v90, %v198
    %vm202 = vcmp.eq.s32.totalorder %v91, %v198
    %vm203 = vcmp.eq.s32.totalorder %v92, %v198
    %vm204 = vcmp.eq.s32.totalorder %v93, %v198
    %vm205 = vcmp.eq.s32.totalorder %v94, %v198
    %vm206 = vmor %vm188, %vm199
    %vm207 = vmor %vm189, %vm200
    %vm208 = vmor %vm190, %vm201
    %vm209 = vmor %vm191, %vm202
    %vm210 = vmor %vm192, %vm203
    %vm211 = vmor %vm193, %vm204
    %vm212 = vmor %vm194, %vm205
    %v213 = vadd.s32 %v86, 392
    %214 = vset.pattern.permute.xlu0 7
    %215 = vperm.xlu0 %214, %v213
    %v216 = vpop.permute.xlu0 %215
    %vm217 = vcmp.eq.s32.totalorder %v88, %v216
    %vm218 = vcmp.eq.s32.totalorder %v89, %v216
    %vm219 = vcmp.eq.s32.totalorder %v90, %v216
    %vm220 = vcmp.eq.s32.totalorder %v91, %v216
    %vm221 = vcmp.eq.s32.totalorder %v92, %v216
    %vm222 = vcmp.eq.s32.totalorder %v93, %v216
    %vm223 = vcmp.eq.s32.totalorder %v94, %v216
    %vm224 = vmor %vm206, %vm217
    %vm225 = vmor %vm207, %vm218
    %vm226 = vmor %vm208, %vm219
    %vm227 = vmor %vm209, %vm220
    %vm228 = vmor %vm210, %vm221
    %vm229 = vmor %vm211, %vm222
    %vm230 = vmor %vm212, %vm223
    %v231 = vadd.s32 %v86, 448
    %232 = vset.pattern.permute.xlu0 8
    %233 = vperm.xlu0 %232, %v231
    %v234 = vpop.permute.xlu0 %233
    %vm235 = vcmp.eq.s32.totalorder %v88, %v234
    %vm236 = vcmp.eq.s32.totalorder %v89, %v234
    %vm237 = vcmp.eq.s32.totalorder %v90, %v234
    %vm238 = vcmp.eq.s32.totalorder %v91, %v234
    %vm239 = vcmp.eq.s32.totalorder %v92, %v234
    %vm240 = vcmp.eq.s32.totalorder %v93, %v234
    %vm241 = vcmp.eq.s32.totalorder %v94, %v234
    %vm242 = vmor %vm224, %vm235
    %vm243 = vmor %vm225, %vm236
    %vm244 = vmor %vm226, %vm237
    %vm245 = vmor %vm227, %vm238
    %vm246 = vmor %vm228, %vm239
    %vm247 = vmor %vm229, %vm240
    %vm248 = vmor %vm230, %vm241
    %v249 = vadd.s32 %v86, 504
    %250 = vset.pattern.permute.xlu0 9
    %251 = vperm.xlu0 %250, %v249
    %v252 = vpop.permute.xlu0 %251
    %vm253 = vcmp.eq.s32.totalorder %v88, %v252
    %vm254 = vcmp.eq.s32.totalorder %v89, %v252
    %vm255 = vcmp.eq.s32.totalorder %v90, %v252
    %vm256 = vcmp.eq.s32.totalorder %v91, %v252
    %vm257 = vcmp.eq.s32.totalorder %v92, %v252
    %vm258 = vcmp.eq.s32.totalorder %v93, %v252
    %vm259 = vcmp.eq.s32.totalorder %v94, %v252
    %vm260 = vmor %vm242, %vm253
    %vm261 = vmor %vm243, %vm254
    %vm262 = vmor %vm244, %vm255
    %vm263 = vmor %vm245, %vm256
    %vm264 = vmor %vm246, %vm257
    %vm265 = vmor %vm247, %vm258
    %vm266 = vmor %vm248, %vm259
    %v267 = vadd.s32 %v86, 560
    %268 = vset.pattern.permute.xlu0 10
    %269 = vperm.xlu0 %268, %v267
    %v270 = vpop.permute.xlu0 %269
    %vm271 = vcmp.eq.s32.totalorder %v88, %v270
    %vm272 = vcmp.eq.s32.totalorder %v89, %v270
    %vm273 = vcmp.eq.s32.totalorder %v90, %v270
    %vm274 = vcmp.eq.s32.totalorder %v91, %v270
    %vm275 = vcmp.eq.s32.totalorder %v92, %v270
    %vm276 = vcmp.eq.s32.totalorder %v93, %v270
    %vm277 = vcmp.eq.s32.totalorder %v94, %v270
    %vm278 = vmor %vm260, %vm271
    %vm279 = vmor %vm261, %vm272
    %vm280 = vmor %vm262, %vm273
    %vm281 = vmor %vm263, %vm274
    %vm282 = vmor %vm264, %vm275
    %vm283 = vmor %vm265, %vm276
    %vm284 = vmor %vm266, %vm277
    %v285 = vadd.s32 %v86, 616
    %286 = vset.pattern.permute.xlu0 11
    %287 = vperm.xlu0 %286, %v285
    %v288 = vpop.permute.xlu0 %287
    %vm289 = vcmp.eq.s32.totalorder %v88, %v288
    %vm290 = vcmp.eq.s32.totalorder %v89, %v288
    %vm291 = vcmp.eq.s32.totalorder %v90, %v288
    %vm292 = vcmp.eq.s32.totalorder %v91, %v288
    %vm293 = vcmp.eq.s32.totalorder %v92, %v288
    %vm294 = vcmp.eq.s32.totalorder %v93, %v288
    %vm295 = vcmp.eq.s32.totalorder %v94, %v288
    %vm296 = vmor %vm278, %vm289
    %vm297 = vmor %vm279, %vm290
    %vm298 = vmor %vm280, %vm291
    %vm299 = vmor %vm281, %vm292
    %vm300 = vmor %vm282, %vm293
    %vm301 = vmor %vm283, %vm294
    %vm302 = vmor %vm284, %vm295
    %v303 = vadd.s32 %v86, 672
    %304 = vset.pattern.permute.xlu0 12
    %305 = vperm.xlu0 %304, %v303
    %v306 = vpop.permute.xlu0 %305
    %vm307 = vcmp.eq.s32.totalorder %v88, %v306
    %vm308 = vcmp.eq.s32.totalorder %v89, %v306
    %vm309 = vcmp.eq.s32.totalorder %v90, %v306
    %vm310 = vcmp.eq.s32.totalorder %v91, %v306
    %vm311 = vcmp.eq.s32.totalorder %v92, %v306
    %vm312 = vcmp.eq.s32.totalorder %v93, %v306
    %vm313 = vcmp.eq.s32.totalorder %v94, %v306
    %vm314 = vmor %vm296, %vm307
    %vm315 = vmor %vm297, %vm308
    %vm316 = vmor %vm298, %vm309
    %vm317 = vmor %vm299, %vm310
    %vm318 = vmor %vm300, %vm311
    %vm319 = vmor %vm301, %vm312
    %vm320 = vmor %vm302, %vm313
    %v321 = vadd.s32 %v86, 728
    %322 = vset.pattern.permute.xlu0 13
    %323 = vperm.xlu0 %322, %v321
    %v324 = vpop.permute.xlu0 %323
    %vm325 = vcmp.eq.s32.totalorder %v88, %v324
    %vm326 = vcmp.eq.s32.totalorder %v89, %v324
    %vm327 = vcmp.eq.s32.totalorder %v90, %v324
    %vm328 = vcmp.eq.s32.totalorder %v91, %v324
    %vm329 = vcmp.eq.s32.totalorder %v92, %v324
    %vm330 = vcmp.eq.s32.totalorder %v93, %v324
    %vm331 = vcmp.eq.s32.totalorder %v94, %v324
    %vm332 = vmor %vm314, %vm325
    %vm333 = vmor %vm315, %vm326
    %vm334 = vmor %vm316, %vm327
    %vm335 = vmor %vm317, %vm328
    %vm336 = vmor %vm318, %vm329
    %vm337 = vmor %vm319, %vm330
    %vm338 = vmor %vm320, %vm331
    %v339 = vadd.s32 %v86, 784
    %340 = vset.pattern.permute.xlu0 14
    %341 = vperm.xlu0 %340, %v339
    %v342 = vpop.permute.xlu0 %341
    %vm343 = vcmp.eq.s32.totalorder %v88, %v342
    %vm344 = vcmp.eq.s32.totalorder %v89, %v342
    %vm345 = vcmp.eq.s32.totalorder %v90, %v342
    %vm346 = vcmp.eq.s32.totalorder %v91, %v342
    %vm347 = vcmp.eq.s32.totalorder %v92, %v342
    %vm348 = vcmp.eq.s32.totalorder %v93, %v342
    %vm349 = vcmp.eq.s32.totalorder %v94, %v342
    %vm350 = vmor %vm332, %vm343
    %vm351 = vmor %vm333, %vm344
    %vm352 = vmor %vm334, %vm345
    %vm353 = vmor %vm335, %vm346
    %vm354 = vmor %vm336, %vm347
    %vm355 = vmor %vm337, %vm348
    %vm356 = vmor %vm338, %vm349
    %v357 = vadd.s32 %v86, 840
    %358 = vset.pattern.permute.xlu0 15
    %359 = vperm.xlu0 %358, %v357
    %v360 = vpop.permute.xlu0 %359
    %vm361 = vcmp.eq.s32.totalorder %v88, %v360
    %vm362 = vcmp.eq.s32.totalorder %v89, %v360
    %vm363 = vcmp.eq.s32.totalorder %v90, %v360
    %vm364 = vcmp.eq.s32.totalorder %v91, %v360
    %vm365 = vcmp.eq.s32.totalorder %v92, %v360
    %vm366 = vcmp.eq.s32.totalorder %v93, %v360
    %vm367 = vcmp.eq.s32.totalorder %v94, %v360
    %vm368 = vmor %vm350, %vm361
    %vm369 = vmor %vm351, %vm362
    %vm370 = vmor %vm352, %vm363
    %vm371 = vmor %vm353, %vm364
    %vm372 = vmor %vm354, %vm365
    %vm373 = vmor %vm355, %vm366
    %vm374 = vmor %vm356, %vm367
    %v375 = vsel %vm368, 1, 0
    %v376 = vsel %vm369, 1, 0
    %v377 = vsel %vm370, 1, 0
    %v378 = vsel %vm371, 1, 0
    %v379 = vsel %vm372, 1, 0
    %v380 = vsel %vm373, 1, 0
    %v381 = vsel %vm374, 1, 0
    %v382 = vcvt.s32.f32 %v375
    %v383 = vcvt.s32.f32 %v376
    %v384 = vcvt.s32.f32 %v377
    %v385 = vcvt.s32.f32 %v378
    %v386 = vcvt.s32.f32 %v379
    %v387 = vcvt.s32.f32 %v380
    %v388 = vcvt.s32.f32 %v381
    %v389 = vld [vmem:[#allocation5] sm:$0xff]
    %v390 = vld [vmem:[#allocation5 + $0x8] sm:$0xff]
    %v391 = vld [vmem:[#allocation5 + $0x10] sm:$0xff]
    %v392 = vld [vmem:[#allocation5 + $0x18] sm:$0xff]
    %v393 = vld [vmem:[#allocation5 + $0x20] sm:$0xff]
    %v394 = vld [vmem:[#allocation5 + $0x28] sm:$0xff]
    %v395 = vld [vmem:[#allocation5 + $0x30] sm:$0xff]
    %v396 = vld [vmem:[#allocation5 + $0x38] sm:$0xff]
    %v397 = vld [vmem:[#allocation5 + $0x40] sm:$0xff]
    %v398 = vld [vmem:[#allocation5 + $0x48] sm:$0xff]
    %v399 = vld [vmem:[#allocation5 + $0x50] sm:$0xff]
    %v400 = vld [vmem:[#allocation5 + $0x58] sm:$0xff]
    %v401 = vld [vmem:[#allocation5 + $0x60] sm:$0xff]
    %v402 = vld [vmem:[#allocation5 + $0x68] sm:$0xff]
    %v403 = vld [vmem:[#allocation5 + $0x70] sm:$0xff]
    %v404 = vld [vmem:[#allocation5 + $0x78] sm:$0xff]
    %v405 = vld [vmem:[#allocation5 + $0x80] sm:$0xff]
    %v406 = vld [vmem:[#allocation5 + $0x88] sm:$0xff]
    %v407 = vld [vmem:[#allocation5 + $0x90] sm:$0xff]
    %v408 = vld [vmem:[#allocation5 + $0x98] sm:$0xff]
    %v409 = vld [vmem:[#allocation5 + $0xa0] sm:$0xff]
    %v410 = vld [vmem:[#allocation5 + $0xa8] sm:$0xff]
    %v411 = vld [vmem:[#allocation5 + $0xb0] sm:$0xff]
    %v412 = vld [vmem:[#allocation5 + $0xb8] sm:$0xff]
    %v413 = vld [vmem:[#allocation5 + $0xc0] sm:$0xff]
    %v414 = vld [vmem:[#allocation5 + $0xc8] sm:$0xff]
    %v415 = vld [vmem:[#allocation5 + $0xd0] sm:$0xff]
    %v416 = vld [vmem:[#allocation5 + $0xd8] sm:$0xff]
    %v417 = vld [vmem:[#allocation5 + $0xe0] sm:$0xff]
    %v418 = vld [vmem:[#allocation5 + $0xe8] sm:$0xff]
    %v419 = vld [vmem:[#allocation5 + $0xf0] sm:$0xff]
    %v420 = vld [vmem:[#allocation5 + $0xf8] sm:$0xff]
    %v421 = vld [vmem:[#allocation5 + $0x100] sm:$0xff]
    %v422 = vld [vmem:[#allocation5 + $0x108] sm:$0xff]
    %v423 = vld [vmem:[#allocation5 + $0x110] sm:$0xff]
    %v424 = vld [vmem:[#allocation5 + $0x118] sm:$0xff]
    %v425 = vld [vmem:[#allocation5 + $0x120] sm:$0xff]
    %v426 = vld [vmem:[#allocation5 + $0x128] sm:$0xff]
    %v427 = vld [vmem:[#allocation5 + $0x130] sm:$0xff]
    %v428 = vld [vmem:[#allocation5 + $0x138] sm:$0xff]
    %v429 = vld [vmem:[#allocation5 + $0x140] sm:$0xff]
    %v430 = vld [vmem:[#allocation5 + $0x148] sm:$0xff]
    %v431 = vld [vmem:[#allocation5 + $0x150] sm:$0xff]
    %v432 = vld [vmem:[#allocation5 + $0x158] sm:$0xff]
    %v433 = vld [vmem:[#allocation5 + $0x160] sm:$0xff]
    %v434 = vld [vmem:[#allocation5 + $0x168] sm:$0xff]
    %v435 = vld [vmem:[#allocation5 + $0x170] sm:$0xff]
    %v436 = vld [vmem:[#allocation5 + $0x178] sm:$0xff]
    %v437 = vld [vmem:[#allocation5 + $0x180] sm:$0xff]
    %v438 = vld [vmem:[#allocation5 + $0x188] sm:$0xff]
    %v439 = vld [vmem:[#allocation5 + $0x190] sm:$0xff]
    %v440 = vld [vmem:[#allocation5 + $0x198] sm:$0xff]
    %v441 = vld [vmem:[#allocation5 + $0x1a0] sm:$0xff]
    %v442 = vld [vmem:[#allocation5 + $0x1a8] sm:$0xff]
    %v443 = vld [vmem:[#allocation5 + $0x1b0] sm:$0xff]
    %v444 = vld [vmem:[#allocation5 + $0x1b8] sm:$0xff]
    %v445 = vld [vmem:[#allocation5 + $0x1c0] sm:$0xff]
    %v446 = vld [vmem:[#allocation5 + $0x1c8] sm:$0xff]
    %v447 = vld [vmem:[#allocation5 + $0x1d0] sm:$0xff]
    %v448 = vld [vmem:[#allocation5 + $0x1d8] sm:$0xff]
    %v449 = vld [vmem:[#allocation5 + $0x1e0] sm:$0xff]
    %v450 = vld [vmem:[#allocation5 + $0x1e8] sm:$0xff]
    %v451 = vld [vmem:[#allocation5 + $0x1f0] sm:$0xff]
    %v452 = vld [vmem:[#allocation5 + $0x1f8] sm:$0xff]
    %v453 = vld [vmem:[#allocation5 + $0x200] sm:$0xff]
    %v454 = vld [vmem:[#allocation5 + $0x208] sm:$0xff]
    %v455 = vld [vmem:[#allocation5 + $0x210] sm:$0xff]
    %v456 = vld [vmem:[#allocation5 + $0x218] sm:$0xff]
    %v457 = vld [vmem:[#allocation5 + $0x220] sm:$0xff]
    %v458 = vld [vmem:[#allocation5 + $0x228] sm:$0xff]
    %v459 = vld [vmem:[#allocation5 + $0x230] sm:$0xff]
    %v460 = vld [vmem:[#allocation5 + $0x238] sm:$0xff]
    %v461 = vld [vmem:[#allocation5 + $0x240] sm:$0xff]
    %v462 = vld [vmem:[#allocation5 + $0x248] sm:$0xff]
    %v463 = vld [vmem:[#allocation5 + $0x250] sm:$0xff]
    %v464 = vld [vmem:[#allocation5 + $0x258] sm:$0xff]
    %v465 = vld [vmem:[#allocation5 + $0x260] sm:$0xff]
    %v466 = vld [vmem:[#allocation5 + $0x268] sm:$0xff]
    %v467 = vld [vmem:[#allocation5 + $0x270] sm:$0xff]
    %v468 = vld [vmem:[#allocation5 + $0x278] sm:$0xff]
    %v469 = vld [vmem:[#allocation5 + $0x280] sm:$0xff]
    %v470 = vld [vmem:[#allocation5 + $0x288] sm:$0xff]
    %v471 = vld [vmem:[#allocation5 + $0x290] sm:$0xff]
    %v472 = vld [vmem:[#allocation5 + $0x298] sm:$0xff]
    %v473 = vld [vmem:[#allocation5 + $0x2a0] sm:$0xff]
    %v474 = vld [vmem:[#allocation5 + $0x2a8] sm:$0xff]
    %v475 = vld [vmem:[#allocation5 + $0x2b0] sm:$0xff]
    %v476 = vld [vmem:[#allocation5 + $0x2b8] sm:$0xff]
    %v477 = vld [vmem:[#allocation5 + $0x2c0] sm:$0xff]
    %v478 = vld [vmem:[#allocation5 + $0x2c8] sm:$0xff]
    %v479 = vld [vmem:[#allocation5 + $0x2d0] sm:$0xff]
    %v480 = vld [vmem:[#allocation5 + $0x2d8] sm:$0xff]
    %v481 = vld [vmem:[#allocation5 + $0x2e0] sm:$0xff]
    %v482 = vld [vmem:[#allocation5 + $0x2e8] sm:$0xff]
    %v483 = vld [vmem:[#allocation5 + $0x2f0] sm:$0xff]
    %v484 = vld [vmem:[#allocation5 + $0x2f8] sm:$0xff]
    %v485 = vld [vmem:[#allocation5 + $0x300] sm:$0xff]
    %v486 = vld [vmem:[#allocation5 + $0x308] sm:$0xff]
    %v487 = vld [vmem:[#allocation5 + $0x310] sm:$0xff]
    %v488 = vld [vmem:[#allocation5 + $0x318] sm:$0xff]
    %v489 = vld [vmem:[#allocation5 + $0x320] sm:$0xff]
    %v490 = vld [vmem:[#allocation5 + $0x328] sm:$0xff]
    %v491 = vld [vmem:[#allocation5 + $0x330] sm:$0xff]
    %v492 = vld [vmem:[#allocation5 + $0x338] sm:$0xff]
    %v493 = vld [vmem:[#allocation5 + $0x340] sm:$0xff]
    %v494 = vld [vmem:[#allocation5 + $0x348] sm:$0xff]
    %v495 = vld [vmem:[#allocation5 + $0x350] sm:$0xff]
    %v496 = vld [vmem:[#allocation5 + $0x358] sm:$0xff]
    %v497 = vld [vmem:[#allocation5 + $0x360] sm:$0xff]
    %v498 = vld [vmem:[#allocation5 + $0x368] sm:$0xff]
    %v499 = vld [vmem:[#allocation5 + $0x370] sm:$0xff]
    %v500 = vld [vmem:[#allocation5 + $0x378] sm:$0xff]
    %501 = vmatprep.subr.mxu0 0.0
    %502 = vmatpush1.msra.mxu0 %v404
    %503 = vmatprep.subr.mxu0 0.0
    %504 = vmatpush1.msra.mxu0 %v403
    %505 = vmatprep.subr.mxu0 0.0
    %506 = vmatpush1.msra.mxu0 %v402
    %507 = vmatprep.subr.mxu0 0.0
    %508 = vmatpush1.msra.mxu0 %v401
    %509 = vmatprep.subr.mxu0 0.0
    %510 = vmatpush1.msra.mxu0 %v400
    %511 = vmatprep.subr.mxu0 0.0
    %512 = vmatpush1.msra.mxu0 %v399
    %513 = vmatprep.subr.mxu0 0.0
    %514 = vmatpush1.msra.mxu0 %v398
    %515 = vmatprep.subr.mxu0 0.0
    %516 = vmatpush1.msra.mxu0 %v397
    %517 = vmatprep.subr.mxu0 0.0
    %518 = vmatpush1.msra.mxu0 %v396
    %519 = vmatprep.subr.mxu0 0.0
    %520 = vmatpush1.msra.mxu0 %v395
    %521 = vmatprep.subr.mxu0 0.0
    %522 = vmatpush1.msra.mxu0 %v394
    %523 = vmatprep.subr.mxu0 0.0
    %524 = vmatpush1.msra.mxu0 %v393
    %525 = vmatprep.subr.mxu0 0.0
    %526 = vmatpush1.msra.mxu0 %v392
    %527 = vmatprep.subr.mxu0 0.0
    %528 = vmatpush1.msra.mxu0 %v391
    %529 = vmatprep.subr.mxu0 0.0
    %530 = vmatpush1.msra.mxu0 %v390
    %531 = vmatprep.subr.mxu0 0.0
    %532 = vmatpush1.msra.mxu0 %v389
    %533 = vmatprep.subr.mxu0 0.0
    %534 = vmatpush2.msra.mxu0 %v420
    %535 = vmatprep.subr.mxu0 0.0
    %536 = vmatpush2.msra.mxu0 %v419
    %537 = vmatprep.subr.mxu0 0.0
    %538 = vmatpush2.msra.mxu0 %v418
    %539 = vmatprep.subr.mxu0 0.0
    %540 = vmatpush2.msra.mxu0 %v417
    %541 = vmatprep.subr.mxu0 0.0
    %542 = vmatpush2.msra.mxu0 %v416
    %543 = vmatprep.subr.mxu0 0.0
    %544 = vmatpush2.msra.mxu0 %v415
    %545 = vmatprep.subr.mxu0 0.0
    %546 = vmatpush2.msra.mxu0 %v414
    %547 = vmatprep.subr.mxu0 0.0
    %548 = vmatpush2.msra.mxu0 %v413
    %549 = vmatprep.subr.mxu0 0.0
    %550 = vmatpush2.msra.mxu0 %v412
    %551 = vmatprep.subr.mxu0 0.0
    %552 = vmatpush2.msra.mxu0 %v411
    %553 = vmatprep.subr.mxu0 0.0
    %554 = vmatpush2.msra.mxu0 %v410
    %555 = vmatprep.subr.mxu0 0.0
    %556 = vmatpush2.msra.mxu0 %v409
    %557 = vmatprep.subr.mxu0 0.0
    %558 = vmatpush2.msra.mxu0 %v408
    %559 = vmatprep.subr.mxu0 0.0
    %560 = vmatpush2.msra.mxu0 %v407
    %561 = vmatprep.subr.mxu0 0.0
    %562 = vmatpush2.msra.mxu0 %v406
    %563 = vmatprep.subr.mxu0 0.0
    %564 = vmatpush2.msra.mxu0 %v405
    %565 = vmatprep.mubr.f32.mxu0 %v383
    %566 = vmatmul.mubr.f32.gmra.mxu0 %v382
    %v567 = vpop.f32.mrf.mxu0
    %v568 = vadd.f32 0.0, %v567
    %v569 = vpop.f32.mrf.mxu0
    %570 = vdwg.mxu0
    %571 = vmatprep.subr.mxu0 0.0
    %572 = vmatpush1.msra.mxu0 %v436
    %573 = vmatprep.subr.mxu0 0.0
    %574 = vmatpush1.msra.mxu0 %v435
    %575 = vmatprep.subr.mxu0 0.0
    %576 = vmatpush1.msra.mxu0 %v434
    %577 = vmatprep.subr.mxu0 0.0
    %578 = vmatpush1.msra.mxu0 %v433
    %579 = vmatprep.subr.mxu0 0.0
    %580 = vmatpush1.msra.mxu0 %v432
    %581 = vmatprep.subr.mxu0 0.0
    %582 = vmatpush1.msra.mxu0 %v431
    %583 = vmatprep.subr.mxu0 0.0
    %584 = vmatpush1.msra.mxu0 %v430
    %585 = vmatprep.subr.mxu0 0.0
    %586 = vmatpush1.msra.mxu0 %v429
    %587 = vmatprep.subr.mxu0 0.0
    %588 = vmatpush1.msra.mxu0 %v428
    %589 = vmatprep.subr.mxu0 0.0
    %590 = vmatpush1.msra.mxu0 %v427
    %591 = vmatprep.subr.mxu0 0.0
    %592 = vmatpush1.msra.mxu0 %v426
    %593 = vmatprep.subr.mxu0 0.0
    %594 = vmatpush1.msra.mxu0 %v425
    %595 = vmatprep.subr.mxu0 0.0
    %596 = vmatpush1.msra.mxu0 %v424
    %597 = vmatprep.subr.mxu0 0.0
    %598 = vmatpush1.msra.mxu0 %v423
    %599 = vmatprep.subr.mxu0 0.0
    %600 = vmatpush1.msra.mxu0 %v422
    %601 = vmatprep.subr.mxu0 0.0
    %602 = vmatpush1.msra.mxu0 %v421
    %603 = vmatprep.subr.mxu0 0.0
    %604 = vmatpush2.msra.mxu0 %v452
    %605 = vmatprep.subr.mxu0 0.0
    %606 = vmatpush2.msra.mxu0 %v451
    %607 = vmatprep.subr.mxu0 0.0
    %608 = vmatpush2.msra.mxu0 %v450
    %609 = vmatprep.subr.mxu0 0.0
    %610 = vmatpush2.msra.mxu0 %v449
    %611 = vmatprep.subr.mxu0 0.0
    %612 = vmatpush2.msra.mxu0 %v448
    %613 = vmatprep.subr.mxu0 0.0
    %614 = vmatpush2.msra.mxu0 %v447
    %615 = vmatprep.subr.mxu0 0.0
    %616 = vmatpush2.msra.mxu0 %v446
    %617 = vmatprep.subr.mxu0 0.0
    %618 = vmatpush2.msra.mxu0 %v445
    %619 = vmatprep.subr.mxu0 0.0
    %620 = vmatpush2.msra.mxu0 %v444
    %621 = vmatprep.subr.mxu0 0.0
    %622 = vmatpush2.msra.mxu0 %v443
    %623 = vmatprep.subr.mxu0 0.0
    %624 = vmatpush2.msra.mxu0 %v442
    %625 = vmatprep.subr.mxu0 0.0
    %626 = vmatpush2.msra.mxu0 %v441
    %627 = vmatprep.subr.mxu0 0.0
    %628 = vmatpush2.msra.mxu0 %v440
    %629 = vmatprep.subr.mxu0 0.0
    %630 = vmatpush2.msra.mxu0 %v439
    %631 = vmatprep.subr.mxu0 0.0
    %632 = vmatpush2.msra.mxu0 %v438
    %633 = vmatprep.subr.mxu0 0.0
    %634 = vmatpush2.msra.mxu0 %v437
    %635 = vmatprep.mubr.f32.mxu0 %v385
    %636 = vmatmul.mubr.f32.gmra.mxu0 %v384
    %v637 = vpop.f32.mrf.mxu0
    %v638 = vadd.f32 %v568, %v637
    %v639 = vpop.f32.mrf.mxu0
    %640 = vdwg.mxu0
    %641 = vmatprep.subr.mxu0 0.0
    %642 = vmatpush1.msra.mxu0 %v468
    %643 = vmatprep.subr.mxu0 0.0
    %644 = vmatpush1.msra.mxu0 %v467
    %645 = vmatprep.subr.mxu0 0.0
    %646 = vmatpush1.msra.mxu0 %v466
    %647 = vmatprep.subr.mxu0 0.0
    %648 = vmatpush1.msra.mxu0 %v465
    %649 = vmatprep.subr.mxu0 0.0
    %650 = vmatpush1.msra.mxu0 %v464
    %651 = vmatprep.subr.mxu0 0.0
    %652 = vmatpush1.msra.mxu0 %v463
    %653 = vmatprep.subr.mxu0 0.0
    %654 = vmatpush1.msra.mxu0 %v462
    %655 = vmatprep.subr.mxu0 0.0
    %656 = vmatpush1.msra.mxu0 %v461
    %657 = vmatprep.subr.mxu0 0.0
    %658 = vmatpush1.msra.mxu0 %v460
    %659 = vmatprep.subr.mxu0 0.0
    %660 = vmatpush1.msra.mxu0 %v459
    %661 = vmatprep.subr.mxu0 0.0
    %662 = vmatpush1.msra.mxu0 %v458
    %663 = vmatprep.subr.mxu0 0.0
    %664 = vmatpush1.msra.mxu0 %v457
    %665 = vmatprep.subr.mxu0 0.0
    %666 = vmatpush1.msra.mxu0 %v456
    %667 = vmatprep.subr.mxu0 0.0
    %668 = vmatpush1.msra.mxu0 %v455
    %669 = vmatprep.subr.mxu0 0.0
    %670 = vmatpush1.msra.mxu0 %v454
    %671 = vmatprep.subr.mxu0 0.0
    %672 = vmatpush1.msra.mxu0 %v453
    %673 = vmatprep.subr.mxu0 0.0
    %674 = vmatpush2.msra.mxu0 %v484
    %675 = vmatprep.subr.mxu0 0.0
    %676 = vmatpush2.msra.mxu0 %v483
    %677 = vmatprep.subr.mxu0 0.0
    %678 = vmatpush2.msra.mxu0 %v482
    %679 = vmatprep.subr.mxu0 0.0
    %680 = vmatpush2.msra.mxu0 %v481
    %681 = vmatprep.subr.mxu0 0.0
    %682 = vmatpush2.msra.mxu0 %v480
    %683 = vmatprep.subr.mxu0 0.0
    %684 = vmatpush2.msra.mxu0 %v479
    %685 = vmatprep.subr.mxu0 0.0
    %686 = vmatpush2.msra.mxu0 %v478
    %687 = vmatprep.subr.mxu0 0.0
    %688 = vmatpush2.msra.mxu0 %v477
    %689 = vmatprep.subr.mxu0 0.0
    %690 = vmatpush2.msra.mxu0 %v476
    %691 = vmatprep.subr.mxu0 0.0
    %692 = vmatpush2.msra.mxu0 %v475
    %693 = vmatprep.subr.mxu0 0.0
    %694 = vmatpush2.msra.mxu0 %v474
    %695 = vmatprep.subr.mxu0 0.0
    %696 = vmatpush2.msra.mxu0 %v473
    %697 = vmatprep.subr.mxu0 0.0
    %698 = vmatpush2.msra.mxu0 %v472
    %699 = vmatprep.subr.mxu0 0.0
    %700 = vmatpush2.msra.mxu0 %v471
    %701 = vmatprep.subr.mxu0 0.0
    %702 = vmatpush2.msra.mxu0 %v470
    %703 = vmatprep.subr.mxu0 0.0
    %704 = vmatpush2.msra.mxu0 %v469
    %705 = vmatprep.mubr.f32.mxu0 %v387
    %706 = vmatmul.mubr.f32.gmra.mxu0 %v386
    %v707 = vpop.f32.mrf.mxu0
    %v708 = vadd.f32 %v638, %v707
    %v709 = vpop.f32.mrf.mxu0
    %710 = vdwg.mxu0
    %711 = vmatprep.subr.mxu0 0.0
    %712 = vmatpush1.msra.mxu0 %v500
    %713 = vmatprep.subr.mxu0 0.0
    %714 = vmatpush1.msra.mxu0 %v499
    %715 = vmatprep.subr.mxu0 0.0
    %716 = vmatpush1.msra.mxu0 %v498
    %717 = vmatprep.subr.mxu0 0.0
    %718 = vmatpush1.msra.mxu0 %v497
    %719 = vmatprep.subr.mxu0 0.0
    %720 = vmatpush1.msra.mxu0 %v496
    %721 = vmatprep.subr.mxu0 0.0
    %722 = vmatpush1.msra.mxu0 %v495
    %723 = vmatprep.subr.mxu0 0.0
    %724 = vmatpush1.msra.mxu0 %v494
    %725 = vmatprep.subr.mxu0 0.0
    %726 = vmatpush1.msra.mxu0 %v493
    %727 = vmatprep.subr.mxu0 0.0
    %728 = vmatpush1.msra.mxu0 %v492
    %729 = vmatprep.subr.mxu0 0.0
    %730 = vmatpush1.msra.mxu0 %v491
    %731 = vmatprep.subr.mxu0 0.0
    %732 = vmatpush1.msra.mxu0 %v490
    %733 = vmatprep.subr.mxu0 0.0
    %734 = vmatpush1.msra.mxu0 %v489
    %735 = vmatprep.subr.mxu0 0.0
    %736 = vmatpush1.msra.mxu0 %v488
    %737 = vmatprep.subr.mxu0 0.0
    %738 = vmatpush1.msra.mxu0 %v487
    %739 = vmatprep.subr.mxu0 0.0
    %740 = vmatpush1.msra.mxu0 %v486
    %741 = vmatprep.subr.mxu0 0.0
    %742 = vmatpush1.msra.mxu0 %v485
    %743 = vmatprep.subr.mxu0 0.0
    %744 = vmatpush2.msra.mxu0 0.0
    %745 = vmatprep.subr.mxu0 0.0
    %746 = vmatpush2.msra.mxu0 0.0
    %747 = vmatprep.subr.mxu0 0.0
    %748 = vmatpush2.msra.mxu0 0.0
    %749 = vmatprep.subr.mxu0 0.0
    %750 = vmatpush2.msra.mxu0 0.0
    %751 = vmatprep.subr.mxu0 0.0
    %752 = vmatpush2.msra.mxu0 0.0
    %753 = vmatprep.subr.mxu0 0.0
    %754 = vmatpush2.msra.mxu0 0.0
    %755 = vmatprep.subr.mxu0 0.0
    %756 = vmatpush2.msra.mxu0 0.0
    %757 = vmatprep.subr.mxu0 0.0
    %758 = vmatpush2.msra.mxu0 0.0
    %759 = vmatprep.subr.mxu0 0.0
    %760 = vmatpush2.msra.mxu0 0.0
    %761 = vmatprep.subr.mxu0 0.0
    %762 = vmatpush2.msra.mxu0 0.0
    %763 = vmatprep.subr.mxu0 0.0
    %764 = vmatpush2.msra.mxu0 0.0
    %765 = vmatprep.subr.mxu0 0.0
    %766 = vmatpush2.msra.mxu0 0.0
    %767 = vmatprep.subr.mxu0 0.0
    %768 = vmatpush2.msra.mxu0 0.0
    %769 = vmatprep.subr.mxu0 0.0
    %770 = vmatpush2.msra.mxu0 0.0
    %771 = vmatprep.subr.mxu0 0.0
    %772 = vmatpush2.msra.mxu0 0.0
    %773 = vmatprep.subr.mxu0 0.0
    %774 = vmatpush2.msra.mxu0 0.0
    %775 = vmatprep.mubr.f32.mxu0 0.0
    %776 = vmatmul.mubr.f32.gmra.mxu0 %v388
    %v777 = vpop.f32.mrf.mxu0
    %v778 = vadd.f32 %v708, %v777
    %v779 = vpop.f32.mrf.mxu0
    %780 = vdwg.mxu0
    %v781 = vld [vmem:[%s2] sm:$0x1]
    %v782 = vld [vmem:[%s3] sm:$0x1]
    %v783 = vrot.slane %v778, 4
    %v784 = vadd.f32 %v778, %v783
    %v785 = vrot.slane %v784, 2
    %v786 = vadd.f32 %v784, %v785
    %v787 = vrot.slane %v786, 1
    %v788 = vadd.f32 %v786, %v787
    %v789 = vmul.f32 %v778, %v778
    %v790 = vrot.slane %v789, 4
    %v791 = vadd.f32 %v789, %v790
    %v792 = vrot.slane %v791, 2
    %v793 = vadd.f32 %v791, %v792
    %v794 = vrot.slane %v793, 1
    %v795 = vadd.f32 %v793, %v794
    %v796 = vmul.f32 %v788, 0.125
    %v797 = vmul.f32 %v795, 0.125
    %v798 = vmul.f32 %v796, %v796
    %v799 = vsub.f32 %v797, %v798
    %v800 = vmax.f32 %v799, 0.0
    %v801 = vadd.f32 %v800, 1e-05
    %v802 = vrsqrt.pop %v801
    %v803 = vmul.f32 %v781, %v802
    %v804 = vmul.f32 %v796, %v803
    %v805 = vsub.f32 %v782, %v804
    %v807 = vlaneseq
    %v808 = vshrl.u32 %v807, 7
    %v809 = vsub.s32 0, %v808
    %v810 = vrot.slane %v803, %v809
    %v812 = vmul.f32 %v778, %v810
    %v814 = vlaneseq
    %v815 = vshrl.u32 %v814, 7
    %v816 = vsub.s32 0, %v815
    %v817 = vrot.slane %v805, %v816
    %v819 = vadd.f32 %v812, %v817
    %v820 = vand.u32 2147483647, %v819
    %v821 = vadd.f32 %v820, 1.0
    %v822 = vrcp.pop %v821
    %v823 = vmul.f32 %v819, %v822
    %v824 = vld [vmem:[#allocation7] sm:$0xff]
    %v825 = vld [vmem:[#allocation7 + $0x8] sm:$0xff]
    %v826 = vld [vmem:[#allocation7 + $0x10] sm:$0xff]
    %v827 = vld [vmem:[#allocation7 + $0x18] sm:$0xff]
    %v828 = vld [vmem:[#allocation7 + $0x20] sm:$0xff]
    %v829 = vld [vmem:[#allocation7 + $0x28] sm:$0xff]
    %v830 = vld [vmem:[#allocation7 + $0x30] sm:$0xff]
    %v831 = vld [vmem:[#allocation7 + $0x38] sm:$0xff]
    %v832 = vld [vmem:[#allocation7 + $0x40] sm:$0xff]
    %v833 = vld [vmem:[#allocation7 + $0x48] sm:$0xff]
    %v834 = vld [vmem:[#allocation7 + $0x50] sm:$0xff]
    %v835 = vld [vmem:[#allocation7 + $0x58] sm:$0xff]
    %v836 = vld [vmem:[#allocation7 + $0x60] sm:$0xff]
    %v837 = vld [vmem:[#allocation7 + $0x68] sm:$0xff]
    %v838 = vld [vmem:[#allocation7 + $0x70] sm:$0xff]
    %v839 = vld [vmem:[#allocation7 + $0x78] sm:$0xff]
    %840 = vmatprep.subr.mxu0 0.0
    %841 = vmatpush1.msra.mxu0 %v839
    %842 = vmatprep.subr.mxu0 0.0
    %843 = vmatpush1.msra.mxu0 %v838
    %844 = vmatprep.subr.mxu0 0.0
    %845 = vmatpush1.msra.mxu0 %v837
    %846 = vmatprep.subr.mxu0 0.0
    %847 = vmatpush1.msra.mxu0 %v836
    %848 = vmatprep.subr.mxu0 0.0
    %849 = vmatpush1.msra.mxu0 %v835
    %850 = vmatprep.subr.mxu0 0.0
    %851 = vmatpush1.msra.mxu0 %v834
    %852 = vmatprep.subr.mxu0 0.0
    %853 = vmatpush1.msra.mxu0 %v833
    %854 = vmatprep.subr.mxu0 0.0
    %855 = vmatpush1.msra.mxu0 %v832
    %856 = vmatprep.subr.mxu0 0.0
    %857 = vmatpush1.msra.mxu0 %v831
    %858 = vmatprep.subr.mxu0 0.0
    %859 = vmatpush1.msra.mxu0 %v830
    %860 = vmatprep.subr.mxu0 0.0
    %861 = vmatpush1.msra.mxu0 %v829
    %862 = vmatprep.subr.mxu0 0.0
    %863 = vmatpush1.msra.mxu0 %v828
    %864 = vmatprep.subr.mxu0 0.0
    %865 = vmatpush1.msra.mxu0 %v827
    %866 = vmatprep.subr.mxu0 0.0
    %867 = vmatpush1.msra.mxu0 %v826
    %868 = vmatprep.subr.mxu0 0.0
    %869 = vmatpush1.msra.mxu0 %v825
    %870 = vmatprep.subr.mxu0 0.0
    %871 = vmatpush1.msra.mxu0 %v824
    %872 = vmatprep.subr.mxu0 0.0
    %873 = vmatpush2.msra.mxu0 0.0
    %874 = vmatprep.subr.mxu0 0.0
    %875 = vmatpush2.msra.mxu0 0.0
    %876 = vmatprep.subr.mxu0 0.0
    %877 = vmatpush2.msra.mxu0 0.0
    %878 = vmatprep.subr.mxu0 0.0
    %879 = vmatpush2.msra.mxu0 0.0
    %880 = vmatprep.subr.mxu0 0.0
    %881 = vmatpush2.msra.mxu0 0.0
    %882 = vmatprep.subr.mxu0 0.0
    %883 = vmatpush2.msra.mxu0 0.0
    %884 = vmatprep.subr.mxu0 0.0
    %885 = vmatpush2.msra.mxu0 0.0
    %886 = vmatprep.subr.mxu0 0.0
    %887 = vmatpush2.msra.mxu0 0.0
    %888 = vmatprep.subr.mxu0 0.0
    %889 = vmatpush2.msra.mxu0 0.0
    %890 = vmatprep.subr.mxu0 0.0
    %891 = vmatpush2.msra.mxu0 0.0
    %892 = vmatprep.subr.mxu0 0.0
    %893 = vmatpush2.msra.mxu0 0.0
    %894 = vmatprep.subr.mxu0 0.0
    %895 = vmatpush2.msra.mxu0 0.0
    %896 = vmatprep.subr.mxu0 0.0
    %897 = vmatpush2.msra.mxu0 0.0
    %898 = vmatprep.subr.mxu0 0.0
    %899 = vmatpush2.msra.mxu0 0.0
    %900 = vmatprep.subr.mxu0 0.0
    %901 = vmatpush2.msra.mxu0 0.0
    %902 = vmatprep.subr.mxu0 0.0
    %903 = vmatpush2.msra.mxu0 0.0
    %904 = vmatprep.mubr.f32.mxu0 0.0
    %905 = vmatmul.mubr.f32.gmra.mxu0 %v823
    %v906 = vpop.f32.mrf.mxu0
    %v907 = vadd.f32 0.0, %v906
    %v908 = vpop.f32.mrf.mxu0
    %909 = vdwg.mxu0
    %v910 = vld [vmem:[%s5] sm:$0x1]
    %v911 = vld [vmem:[%s6] sm:$0x1]
    %v912 = vrot.slane %v907, 4
    %v913 = vadd.f32 %v907, %v912
    %v914 = vrot.slane %v913, 2
    %v915 = vadd.f32 %v913, %v914
    %v916 = vrot.slane %v915, 1
    %v917 = vadd.f32 %v915, %v916
    %v918 = vmul.f32 %v907, %v907
    %v919 = vrot.slane %v918, 4
    %v920 = vadd.f32 %v918, %v919
    %v921 = vrot.slane %v920, 2
    %v922 = vadd.f32 %v920, %v921
    %v923 = vrot.slane %v922, 1
    %v924 = vadd.f32 %v922, %v923
    %v925 = vmul.f32 %v917, 0.125
    %v926 = vmul.f32 %v924, 0.125
    %v927 = vmul.f32 %v925, %v925
    %v928 = vsub.f32 %v926, %v927
    %v929 = vmax.f32 %v928, 0.0
    %v930 = vadd.f32 %v929, 1e-05
    %v931 = vrsqrt.pop %v930
    %v932 = vmul.f32 %v910, %v931
    %v933 = vmul.f32 %v925, %v932
    %v934 = vsub.f32 %v911, %v933
    %v936 = vlaneseq
    %v937 = vshrl.u32 %v936, 7
    %v938 = vsub.s32 0, %v937
    %v939 = vrot.slane %v932, %v938
    %v941 = vmul.f32 %v907, %v939
    %v943 = vlaneseq
    %v944 = vshrl.u32 %v943, 7
    %v945 = vsub.s32 0, %v944
    %v946 = vrot.slane %v934, %v945
    %v948 = vadd.f32 %v941, %v946
    %v949 = vand.u32 2147483647, %v948
    %v950 = vadd.f32 %v949, 1.0
    %v951 = vrcp.pop %v950
    %v952 = vmul.f32 %v948, %v951
    %v953 = vld [vmem:[#allocation8] sm:$0xff]
    %v954 = vld [vmem:[#allocation8 + $0x8] sm:$0xff]
    %v955 = vld [vmem:[#allocation8 + $0x10] sm:$0xff]
    %v956 = vld [vmem:[#allocation8 + $0x18] sm:$0xff]
    %v957 = vld [vmem:[#allocation8 + $0x20] sm:$0xff]
    %v958 = vld [vmem:[#allocation8 + $0x28] sm:$0xff]
    %v959 = vld [vmem:[#allocation8 + $0x30] sm:$0xff]
    %v960 = vld [vmem:[#allocation8 + $0x38] sm:$0xff]
    %v961 = vld [vmem:[#allocation8 + $0x40] sm:$0xff]
    %v962 = vld [vmem:[#allocation8 + $0x48] sm:$0xff]
    %v963 = vld [vmem:[#allocation8 + $0x50] sm:$0xff]
    %v964 = vld [vmem:[#allocation8 + $0x58] sm:$0xff]
    %v965 = vld [vmem:[#allocation8 + $0x60] sm:$0xff]
    %v966 = vld [vmem:[#allocation8 + $0x68] sm:$0xff]
    %v967 = vld [vmem:[#allocation8 + $0x70] sm:$0xff]
    %v968 = vld [vmem:[#allocation8 + $0x78] sm:$0xff]
    %v969 = vld [vmem:[%s8] sm:$0x1]
    %v971 = vlaneseq
    %v972 = vshrl.u32 %v971, 7
    %v973 = vsub.s32 0, %v972
    %v974 = vrot.slane %v969, %v973
    %976 = vmatprep.subr.mxu0 0.0
    %977 = vmatpush1.msra.mxu0 %v968
    %978 = vmatprep.subr.mxu0 0.0
    %979 = vmatpush1.msra.mxu0 %v967
    %980 = vmatprep.subr.mxu0 0.0
    %981 = vmatpush1.msra.mxu0 %v966
    %982 = vmatprep.subr.mxu0 0.0
    %983 = vmatpush1.msra.mxu0 %v965
    %984 = vmatprep.subr.mxu0 0.0
    %985 = vmatpush1.msra.mxu0 %v964
    %986 = vmatprep.subr.mxu0 0.0
    %987 = vmatpush1.msra.mxu0 %v963
    %988 = vmatprep.subr.mxu0 0.0
    %989 = vmatpush1.msra.mxu0 %v962
    %990 = vmatprep.subr.mxu0 0.0
    %991 = vmatpush1.msra.mxu0 %v961
    %992 = vmatprep.subr.mxu0 0.0
    %993 = vmatpush1.msra.mxu0 %v960
    %994 = vmatprep.subr.mxu0 0.0
    %995 = vmatpush1.msra.mxu0 %v959
    %996 = vmatprep.subr.mxu0 0.0
    %997 = vmatpush1.msra.mxu0 %v958
    %998 = vmatprep.subr.mxu0 0.0
    %999 = vmatpush1.msra.mxu0 %v957
    %1000 = vmatprep.subr.mxu0 0.0
    %1001 = vmatpush1.msra.mxu0 %v956
    %1002 = vmatprep.subr.mxu0 0.0
    %1003 = vmatpush1.msra.mxu0 %v955
    %1004 = vmatprep.subr.mxu0 0.0
    %1005 = vmatpush1.msra.mxu0 %v954
    %1006 = vmatprep.subr.mxu0 0.0
    %1007 = vmatpush1.msra.mxu0 %v953
    %1008 = vmatprep.subr.mxu0 0.0
    %1009 = vmatpush2.msra.mxu0 0.0
    %1010 = vmatprep.subr.mxu0 0.0
    %1011 = vmatpush2.msra.mxu0 0.0
    %1012 = vmatprep.subr.mxu0 0.0
    %1013 = vmatpush2.msra.mxu0 0.0
    %1014 = vmatprep.subr.mxu0 0.0
    %1015 = vmatpush2.msra.mxu0 0.0
    %1016 = vmatprep.subr.mxu0 0.0
    %1017 = vmatpush2.msra.mxu0 0.0
    %1018 = vmatprep.subr.mxu0 0.0
    %1019 = vmatpush2.msra.mxu0 0.0
    %1020 = vmatprep.subr.mxu0 0.0
    %1021 = vmatpush2.msra.mxu0 0.0
    %1022 = vmatprep.subr.mxu0 0.0
    %1023 = vmatpush2.msra.mxu0 0.0
    %1024 = vmatprep.subr.mxu0 0.0
    %1025 = vmatpush2.msra.mxu0 0.0
    %1026 = vmatprep.subr.mxu0 0.0
    %1027 = vmatpush2.msra.mxu0 0.0
    %1028 = vmatprep.subr.mxu0 0.0
    %1029 = vmatpush2.msra.mxu0 0.0
    %1030 = vmatprep.subr.mxu0 0.0
    %1031 = vmatpush2.msra.mxu0 0.0
    %1032 = vmatprep.subr.mxu0 0.0
    %1033 = vmatpush2.msra.mxu0 0.0
    %1034 = vmatprep.subr.mxu0 0.0
    %1035 = vmatpush2.msra.mxu0 0.0
    %1036 = vmatprep.subr.mxu0 0.0
    %1037 = vmatpush2.msra.mxu0 0.0
    %1038 = vmatprep.subr.mxu0 0.0
    %1039 = vmatpush2.msra.mxu0 0.0
    %1040 = vmatprep.mubr.f32.mxu0 0.0
    %1041 = vmatmul.mubr.f32.gmra.mxu0 %v952
    %v1042 = vpop.f32.mrf.mxu0
    %v1043 = vadd.f32 %v974, %v1042
    %v1044 = vpop.f32.mrf.mxu0
    %1045 = vdwg.mxu0
    %1046 = vst [vmem:[#allocation10] sm:$0xff] %v1043
    // Predicated region
    $region54: #{tpu_custom_call.1} parent=1 // pred_check
      _
    $region55: #{tpu_custom_call.1} parent=1 // pred_check_branch
      %1048 = sbr.rel (0) target = $region57
    $region56: #{tpu_custom_call.1} parent=1 // pred_region
      %s1050 = ssub.s32 128, 128
      %1051 = vsyncadd [#allocation4], %s1050
      %s1053 = sshll.u32 [#allocation10], 4
      %s1054 = int_to_ptr.vmem [resolvable:$true] %s1053
      %1056 = dma.vmem_to_hbm [thread:$0]  %s1054, 128, %s9, [#allocation4]
    $region57: #{tpu_custom_call.1} parent=1 // pred_fallthru
      _
    // Predicated region
    $region58: #{tpu_custom_call.1} parent=1 // pred_check
      _
    $region59: #{tpu_custom_call.1} parent=1 // pred_check_branch
      %1058 = sbr.rel (0) target = $region61
    $region60: #{tpu_custom_call.1} parent=1 // pred_region
      %1059 = dma.done [#allocation4], 128
    $region61: #{tpu_custom_call.1} parent=1 // pred_fallthru
      _
    %1060 = vsyncpa [#allocation3], 1
    %1061 = vsyncpa [#allocation6], 1
    %1062 = vsyncpa [#allocation9], 1
    %1063 = vsyncpa [#allocation4], 1

</llo_original>
